<compile_context>
chip_gen: v7x
topology: tpu7x:2x2x1
jax: 0.10.0
libtpu: 0.0.40
codegen_flags: <defaults>
</compile_context>

<pallas_src>
import functools

import jax
import jax.numpy as jnp
import numpy as np
from jax import lax
from jax.experimental import pallas as pl
from jax.experimental.pallas import tpu as pltpu


def _mha_kernel(x_ref, wqkv_ref, wo_ref, bo_ref, o_ref,
                *, num_heads, head_size, scale):
    """One grid step = one batch element: fused QKV proj + per-head attention +
    output projection accumulated per head (avoids the lane-stitching concat)."""
    T, E = x_ref.shape
    D = head_size

    x = x_ref[...]                                           # (T, E) bf16

    # Fused Q/K/V projection: single full-lane-width MXU matmul (T,E)@(E,3E).
    qkv = jnp.dot(x, wqkv_ref[...],
                  preferred_element_type=jnp.float32)        # (T, 3E) f32
    qkv = qkv.astype(jnp.bfloat16)                           # matmul operands in bf16

    wo = wo_ref[...]                                         # (E, E) bf16 (resident)
    acc = jnp.zeros((T, E), dtype=jnp.float32)               # f32 output accumulator

    for h in range(num_heads):                               # static unroll (tiny H)
        q = qkv[:, h * D:(h + 1) * D]                        # (T, D)
        k = qkv[:, E + h * D:E + (h + 1) * D]                # (T, D)
        v = qkv[:, 2 * E + h * D:2 * E + (h + 1) * D]        # (T, D)

        # scores: contract the head dim of both operands directly — no k.T relayout.
        s = lax.dot_general(q, k, (((1,), (1,)), ((), ())),
                            preferred_element_type=jnp.float32) * scale   # (T, T) f32

        # numerically-stable softmax, elementwise math kept in f32
        s = s - jnp.max(s, axis=-1, keepdims=True)
        p = jnp.exp(s)
        p = p * pl.reciprocal(jnp.sum(p, axis=-1, keepdims=True), approx=True)

        head_out = jnp.dot(p.astype(jnp.bfloat16), v,
                           preferred_element_type=jnp.float32)            # (T, D) f32

        # Output projection folded into the head loop:
        #   concat(head_outs) @ Wo^T == sum_h head_out_h @ Wo^T[h*D:(h+1)*D, :]
        acc = acc + jnp.dot(head_out.astype(jnp.bfloat16),
                            wo[h * D:(h + 1) * D, :],
                            preferred_element_type=jnp.float32)           # (T, E) f32

    o_ref[...] = (acc + bo_ref[...]).astype(o_ref.dtype)


def multi_head_attention(x, wq, wk, wv, wo_t, bo):
    """x: (B,T,E) f32; wq/wk/wv: (H,E,D); wo_t: (E,E) == W_o^T; bo: (E,)."""
    B, T, E = x.shape
    H, _, D = wq.shape
    assert H * D == E

    # Fuse per-head projections: (H,E,D) -> (E, H*D); concat Q|K|V -> (E, 3E).
    def fuse(w):
        return jnp.transpose(w, (1, 0, 2)).reshape(E, H * D)

    wqkv = jnp.concatenate([fuse(wq), fuse(wk), fuse(wv)], axis=-1)       # (E, 3E)

    # bf16 matmul operands (halves DMA/VMEM for the resident weights); f32 accumulate.
    x_bf = x.astype(jnp.bfloat16)
    wqkv_bf = wqkv.astype(jnp.bfloat16)
    wo_bf = wo_t.astype(jnp.bfloat16)
    bo2 = bo.reshape(1, E).astype(jnp.float32)

    kernel = functools.partial(_mha_kernel, num_heads=H, head_size=D,
                               scale=float(E) ** (-0.5))

    return pl.pallas_call(
        kernel,
        out_shape=jax.ShapeDtypeStruct((B, T, E), jnp.float32),
        grid_spec=pltpu.PrefetchScalarGridSpec(
            num_scalar_prefetch=0,
            grid=(B,),
            in_specs=[
                pl.BlockSpec((pl.Squeezed(), T, E), lambda b: (b, 0, 0)),  # x (per batch)
                pl.BlockSpec((E, 3 * E), lambda b: (0, 0)),                # fused Wqkv (resident)
                pl.BlockSpec((E, E), lambda b: (0, 0)),                    # Wo^T (resident)
                pl.BlockSpec((1, E), lambda b: (0, 0)),                    # bias
            ],
            out_specs=pl.BlockSpec((pl.Squeezed(), T, E), lambda b: (b, 0, 0)),
        ),
        compiler_params=pltpu.CompilerParams(
            dimension_semantics=("parallel",)),                            # v7x: 2 TCs
    )(x_bf, wqkv_bf, wo_bf, bo2)


def reference_mha(x, wq, wk, wv, wo_t, bo):
    """Pure-JAX f32 reference mirroring the PyTorch module exactly."""
    B, T, E = x.shape
    H = wq.shape[0]
    outs = []
    for h in range(H):
        q = x @ wq[h]
        k = x @ wk[h]
        v = x @ wv[h]
        s = (q @ jnp.swapaxes(k, -2, -1)) * (E ** -0.5)
        p = jax.nn.softmax(s, axis=-1)
        outs.append(p @ v)
    cat = jnp.concatenate(outs, axis=-1)
    return cat @ wo_t + bo


if __name__ == "__main__":
    # Small configuration, structurally identical to the module.
    EMBEDDING_SIZE = 128
    NUM_HEADS = 4
    HEAD_SIZE = EMBEDDING_SIZE // NUM_HEADS   # 32
    B, T = 2, 8

    key = jax.random.PRNGKey(0)
    kx, kq, kk, kv, kwo, kbo = jax.random.split(key, 6)

    x = jax.random.normal(kx, (B, T, EMBEDDING_SIZE), dtype=jnp.float32)

    # nn.Linear-style uniform init, stored pre-transposed so the math is x @ W.
    def init_linear_t(k, fan_in, fan_out):
        bound = 1.0 / np.sqrt(fan_in)
        return jax.random.uniform(k, (fan_in, fan_out), jnp.float32, -bound, bound)

    wq = jnp.stack([init_linear_t(k, EMBEDDING_SIZE, HEAD_SIZE)
                    for k in jax.random.split(kq, NUM_HEADS)])   # (H, E, D)
    wk = jnp.stack([init_linear_t(k, EMBEDDING_SIZE, HEAD_SIZE)
                    for k in jax.random.split(kk, NUM_HEADS)])
    wv = jnp.stack([init_linear_t(k, EMBEDDING_SIZE, HEAD_SIZE)
                    for k in jax.random.split(kv, NUM_HEADS)])
    wo_t = init_linear_t(kwo, EMBEDDING_SIZE, EMBEDDING_SIZE)    # (E, E) == W_o^T
    bo = jax.random.uniform(kbo, (EMBEDDING_SIZE,), jnp.float32,
                            -1.0 / np.sqrt(EMBEDDING_SIZE),
                            1.0 / np.sqrt(EMBEDDING_SIZE))

    out = multi_head_attention(x, wq, wk, wv, wo_t, bo)
    out = jax.block_until_ready(out)

    ref = reference_mha(x, wq, wk, wv, wo_t, bo)
    # bf16 matmul operands (f32 accumulation) => relax tolerance vs f32 reference.
    np.testing.assert_allclose(np.asarray(out), np.asarray(ref), rtol=2e-2, atol=2e-2)

    print("KERNEL_OK")
</pallas_src>

<mosaic_0001>
module attributes {stable_mosaic.version = 11 : i64} {
  func.func @_mha_kernel(%arg0: i32, %arg1: memref<1x8x128xbf16, #tpu.memory_space<vmem>>, %arg2: memref<128x384xbf16, #tpu.memory_space<vmem>>, %arg3: memref<128x128xbf16, #tpu.memory_space<vmem>>, %arg4: memref<1x128xf32, #tpu.memory_space<vmem>>, %arg5: memref<1x8x128xf32, #tpu.memory_space<vmem>>) attributes {dimension_semantics = [#tpu.dimension_semantics<parallel>], iteration_bounds = array<i64: 2>, scalar_prefetch = 0 : i64, scratch_operands = 0 : i64, tpu.core_type = #tpu.core_type<tc>, window_params = [{transform_indices = @transform_0, window_bounds = array<i64: 1, 8, 128>}, {pipeline_mode = #tpu.pipeline_mode<synchronous>, transform_indices = @transform_1, window_bounds = array<i64: 128, 384>}, {pipeline_mode = #tpu.pipeline_mode<synchronous>, transform_indices = @transform_2, window_bounds = array<i64: 128, 128>}, {pipeline_mode = #tpu.pipeline_mode<synchronous>, transform_indices = @transform_3, window_bounds = array<i64: 1, 128>}, {transform_indices = @transform_4, window_bounds = array<i64: 1, 8, 128>}]} {
    %c0 = arith.constant 0 : index
    %c0_0 = arith.constant 0 : index
    %c0_1 = arith.constant 0 : index
    %0 = vector.load %arg1[%c0, %c0_0, %c0_1] : memref<1x8x128xbf16, #tpu.memory_space<vmem>>, vector<1x8x128xbf16>
    %1 = vector.shape_cast %0 : vector<1x8x128xbf16> to vector<8x128xbf16>
    %c0_2 = arith.constant 0 : index
    %c0_3 = arith.constant 0 : index
    %2 = vector.load %arg2[%c0_2, %c0_3] : memref<128x384xbf16, #tpu.memory_space<vmem>>, vector<128x384xbf16>
    %cst = arith.constant dense<0.000000e+00> : vector<8x384xf32>
    %3 = tpu.matmul %1, %2, %cst {dimension_numbers = #tpu.dot_dimension_numbers<[1], [0], [0], [1], [0, 0, 1, 1], [], []>} : vector<8x128xbf16>, vector<128x384xbf16>, vector<8x384xf32> -> vector<8x384xf32>
    %4 = arith.truncf %3 : vector<8x384xf32> to vector<8x384xbf16>
    %c0_4 = arith.constant 0 : index
    %c0_5 = arith.constant 0 : index
    %5 = vector.load %arg3[%c0_4, %c0_5] : memref<128x128xbf16, #tpu.memory_space<vmem>>, vector<128x128xbf16>
    %cst_6 = arith.constant 0.000000e+00 : f32
    %6 = vector.broadcast %cst_6 : f32 to vector<8x128xf32>
    %7 = vector.extract_strided_slice %4 {offsets = [0, 0], sizes = [8, 32], strides = [1, 1]} : vector<8x384xbf16> to vector<8x32xbf16>
    %8 = vector.extract_strided_slice %4 {offsets = [0, 128], sizes = [8, 32], strides = [1, 1]} : vector<8x384xbf16> to vector<8x32xbf16>
    %9 = vector.extract_strided_slice %4 {offsets = [0, 256], sizes = [8, 32], strides = [1, 1]} : vector<8x384xbf16> to vector<8x32xbf16>
    %cst_7 = arith.constant dense<0.000000e+00> : vector<8x8xf32>
    %10 = tpu.matmul %7, %8, %cst_7 {dimension_numbers = #tpu.dot_dimension_numbers<[1], [1], [0], [0], [0, 0, 1, 0], [], []>} : vector<8x32xbf16>, vector<8x32xbf16>, vector<8x8xf32> -> vector<8x8xf32>
    %cst_8 = arith.constant 0.0883883461 : f32
    %11 = vector.broadcast %cst_8 : f32 to vector<8x8xf32>
    %12 = arith.mulf %10, %11 : vector<8x8xf32>
    %cst_9 = arith.constant dense<0xFF800000> : vector<8xf32>
    %13 = vector.multi_reduction <maximumf>, %12, %cst_9 [1] : vector<8x8xf32> to vector<8xf32>
    %14 = vector.shape_cast %13 : vector<8xf32> to vector<8x1xf32>
    %15 = vector.broadcast %14 : vector<8x1xf32> to vector<8x8xf32>
    %16 = arith.subf %12, %15 : vector<8x8xf32>
    %17 = math.exp %16 : vector<8x8xf32>
    %cst_10 = arith.constant dense<0.000000e+00> : vector<8xf32>
    %18 = vector.multi_reduction <add>, %17, %cst_10 [1] : vector<8x8xf32> to vector<8xf32>
    %19 = vector.shape_cast %18 : vector<8xf32> to vector<8x1xf32>
    %20 = tpu.reciprocal %19 {approx = true} : vector<8x1xf32> -> vector<8x1xf32>
    %21 = vector.broadcast %20 : vector<8x1xf32> to vector<8x8xf32>
    %22 = arith.mulf %17, %21 : vector<8x8xf32>
    %23 = arith.truncf %22 : vector<8x8xf32> to vector<8x8xbf16>
    %cst_11 = arith.constant dense<0.000000e+00> : vector<8x32xf32>
    %24 = tpu.matmul %23, %9, %cst_11 {dimension_numbers = #tpu.dot_dimension_numbers<[1], [0], [0], [1], [0, 0, 1, 1], [], []>} : vector<8x8xbf16>, vector<8x32xbf16>, vector<8x32xf32> -> vector<8x32xf32>
    %25 = arith.truncf %24 : vector<8x32xf32> to vector<8x32xbf16>
    %26 = vector.extract_strided_slice %5 {offsets = [0, 0], sizes = [32, 128], strides = [1, 1]} : vector<128x128xbf16> to vector<32x128xbf16>
    %cst_12 = arith.constant dense<0.000000e+00> : vector<8x128xf32>
    %27 = tpu.matmul %25, %26, %cst_12 {dimension_numbers = #tpu.dot_dimension_numbers<[1], [0], [0], [1], [0, 0, 1, 1], [], []>} : vector<8x32xbf16>, vector<32x128xbf16>, vector<8x128xf32> -> vector<8x128xf32>
    %28 = arith.addf %6, %27 : vector<8x128xf32>
    %29 = vector.extract_strided_slice %4 {offsets = [0, 32], sizes = [8, 32], strides = [1, 1]} : vector<8x384xbf16> to vector<8x32xbf16>
    %30 = vector.extract_strided_slice %4 {offsets = [0, 160], sizes = [8, 32], strides = [1, 1]} : vector<8x384xbf16> to vector<8x32xbf16>
    %31 = vector.extract_strided_slice %4 {offsets = [0, 288], sizes = [8, 32], strides = [1, 1]} : vector<8x384xbf16> to vector<8x32xbf16>
    %cst_13 = arith.constant dense<0.000000e+00> : vector<8x8xf32>
    %32 = tpu.matmul %29, %30, %cst_13 {dimension_numbers = #tpu.dot_dimension_numbers<[1], [1], [0], [0], [0, 0, 1, 0], [], []>} : vector<8x32xbf16>, vector<8x32xbf16>, vector<8x8xf32> -> vector<8x8xf32>
    %cst_14 = arith.constant 0.0883883461 : f32
    %33 = vector.broadcast %cst_14 : f32 to vector<8x8xf32>
    %34 = arith.mulf %32, %33 : vector<8x8xf32>
    %cst_15 = arith.constant dense<0xFF800000> : vector<8xf32>
    %35 = vector.multi_reduction <maximumf>, %34, %cst_15 [1] : vector<8x8xf32> to vector<8xf32>
    %36 = vector.shape_cast %35 : vector<8xf32> to vector<8x1xf32>
    %37 = vector.broadcast %36 : vector<8x1xf32> to vector<8x8xf32>
    %38 = arith.subf %34, %37 : vector<8x8xf32>
    %39 = math.exp %38 : vector<8x8xf32>
    %cst_16 = arith.constant dense<0.000000e+00> : vector<8xf32>
    %40 = vector.multi_reduction <add>, %39, %cst_16 [1] : vector<8x8xf32> to vector<8xf32>
    %41 = vector.shape_cast %40 : vector<8xf32> to vector<8x1xf32>
    %42 = tpu.reciprocal %41 {approx = true} : vector<8x1xf32> -> vector<8x1xf32>
    %43 = vector.broadcast %42 : vector<8x1xf32> to vector<8x8xf32>
    %44 = arith.mulf %39, %43 : vector<8x8xf32>
    %45 = arith.truncf %44 : vector<8x8xf32> to vector<8x8xbf16>
    %cst_17 = arith.constant dense<0.000000e+00> : vector<8x32xf32>
    %46 = tpu.matmul %45, %31, %cst_17 {dimension_numbers = #tpu.dot_dimension_numbers<[1], [0], [0], [1], [0, 0, 1, 1], [], []>} : vector<8x8xbf16>, vector<8x32xbf16>, vector<8x32xf32> -> vector<8x32xf32>
    %47 = arith.truncf %46 : vector<8x32xf32> to vector<8x32xbf16>
    %48 = vector.extract_strided_slice %5 {offsets = [32, 0], sizes = [32, 128], strides = [1, 1]} : vector<128x128xbf16> to vector<32x128xbf16>
    %cst_18 = arith.constant dense<0.000000e+00> : vector<8x128xf32>
    %49 = tpu.matmul %47, %48, %cst_18 {dimension_numbers = #tpu.dot_dimension_numbers<[1], [0], [0], [1], [0, 0, 1, 1], [], []>} : vector<8x32xbf16>, vector<32x128xbf16>, vector<8x128xf32> -> vector<8x128xf32>
    %50 = arith.addf %28, %49 : vector<8x128xf32>
    %51 = vector.extract_strided_slice %4 {offsets = [0, 64], sizes = [8, 32], strides = [1, 1]} : vector<8x384xbf16> to vector<8x32xbf16>
    %52 = vector.extract_strided_slice %4 {offsets = [0, 192], sizes = [8, 32], strides = [1, 1]} : vector<8x384xbf16> to vector<8x32xbf16>
    %53 = vector.extract_strided_slice %4 {offsets = [0, 320], sizes = [8, 32], strides = [1, 1]} : vector<8x384xbf16> to vector<8x32xbf16>
    %cst_19 = arith.constant dense<0.000000e+00> : vector<8x8xf32>
    %54 = tpu.matmul %51, %52, %cst_19 {dimension_numbers = #tpu.dot_dimension_numbers<[1], [1], [0], [0], [0, 0, 1, 0], [], []>} : vector<8x32xbf16>, vector<8x32xbf16>, vector<8x8xf32> -> vector<8x8xf32>
    %cst_20 = arith.constant 0.0883883461 : f32
    %55 = vector.broadcast %cst_20 : f32 to vector<8x8xf32>
    %56 = arith.mulf %54, %55 : vector<8x8xf32>
    %cst_21 = arith.constant dense<0xFF800000> : vector<8xf32>
    %57 = vector.multi_reduction <maximumf>, %56, %cst_21 [1] : vector<8x8xf32> to vector<8xf32>
    %58 = vector.shape_cast %57 : vector<8xf32> to vector<8x1xf32>
    %59 = vector.broadcast %58 : vector<8x1xf32> to vector<8x8xf32>
    %60 = arith.subf %56, %59 : vector<8x8xf32>
    %61 = math.exp %60 : vector<8x8xf32>
    %cst_22 = arith.constant dense<0.000000e+00> : vector<8xf32>
    %62 = vector.multi_reduction <add>, %61, %cst_22 [1] : vector<8x8xf32> to vector<8xf32>
    %63 = vector.shape_cast %62 : vector<8xf32> to vector<8x1xf32>
    %64 = tpu.reciprocal %63 {approx = true} : vector<8x1xf32> -> vector<8x1xf32>
    %65 = vector.broadcast %64 : vector<8x1xf32> to vector<8x8xf32>
    %66 = arith.mulf %61, %65 : vector<8x8xf32>
    %67 = arith.truncf %66 : vector<8x8xf32> to vector<8x8xbf16>
    %cst_23 = arith.constant dense<0.000000e+00> : vector<8x32xf32>
    %68 = tpu.matmul %67, %53, %cst_23 {dimension_numbers = #tpu.dot_dimension_numbers<[1], [0], [0], [1], [0, 0, 1, 1], [], []>} : vector<8x8xbf16>, vector<8x32xbf16>, vector<8x32xf32> -> vector<8x32xf32>
    %69 = arith.truncf %68 : vector<8x32xf32> to vector<8x32xbf16>
    %70 = vector.extract_strided_slice %5 {offsets = [64, 0], sizes = [32, 128], strides = [1, 1]} : vector<128x128xbf16> to vector<32x128xbf16>
    %cst_24 = arith.constant dense<0.000000e+00> : vector<8x128xf32>
    %71 = tpu.matmul %69, %70, %cst_24 {dimension_numbers = #tpu.dot_dimension_numbers<[1], [0], [0], [1], [0, 0, 1, 1], [], []>} : vector<8x32xbf16>, vector<32x128xbf16>, vector<8x128xf32> -> vector<8x128xf32>
    %72 = arith.addf %50, %71 : vector<8x128xf32>
    %73 = vector.extract_strided_slice %4 {offsets = [0, 96], sizes = [8, 32], strides = [1, 1]} : vector<8x384xbf16> to vector<8x32xbf16>
    %74 = vector.extract_strided_slice %4 {offsets = [0, 224], sizes = [8, 32], strides = [1, 1]} : vector<8x384xbf16> to vector<8x32xbf16>
    %75 = vector.extract_strided_slice %4 {offsets = [0, 352], sizes = [8, 32], strides = [1, 1]} : vector<8x384xbf16> to vector<8x32xbf16>
    %cst_25 = arith.constant dense<0.000000e+00> : vector<8x8xf32>
    %76 = tpu.matmul %73, %74, %cst_25 {dimension_numbers = #tpu.dot_dimension_numbers<[1], [1], [0], [0], [0, 0, 1, 0], [], []>} : vector<8x32xbf16>, vector<8x32xbf16>, vector<8x8xf32> -> vector<8x8xf32>
    %cst_26 = arith.constant 0.0883883461 : f32
    %77 = vector.broadcast %cst_26 : f32 to vector<8x8xf32>
    %78 = arith.mulf %76, %77 : vector<8x8xf32>
    %cst_27 = arith.constant dense<0xFF800000> : vector<8xf32>
    %79 = vector.multi_reduction <maximumf>, %78, %cst_27 [1] : vector<8x8xf32> to vector<8xf32>
    %80 = vector.shape_cast %79 : vector<8xf32> to vector<8x1xf32>
    %81 = vector.broadcast %80 : vector<8x1xf32> to vector<8x8xf32>
    %82 = arith.subf %78, %81 : vector<8x8xf32>
    %83 = math.exp %82 : vector<8x8xf32>
    %cst_28 = arith.constant dense<0.000000e+00> : vector<8xf32>
    %84 = vector.multi_reduction <add>, %83, %cst_28 [1] : vector<8x8xf32> to vector<8xf32>
    %85 = vector.shape_cast %84 : vector<8xf32> to vector<8x1xf32>
    %86 = tpu.reciprocal %85 {approx = true} : vector<8x1xf32> -> vector<8x1xf32>
    %87 = vector.broadcast %86 : vector<8x1xf32> to vector<8x8xf32>
    %88 = arith.mulf %83, %87 : vector<8x8xf32>
    %89 = arith.truncf %88 : vector<8x8xf32> to vector<8x8xbf16>
    %cst_29 = arith.constant dense<0.000000e+00> : vector<8x32xf32>
    %90 = tpu.matmul %89, %75, %cst_29 {dimension_numbers = #tpu.dot_dimension_numbers<[1], [0], [0], [1], [0, 0, 1, 1], [], []>} : vector<8x8xbf16>, vector<8x32xbf16>, vector<8x32xf32> -> vector<8x32xf32>
    %91 = arith.truncf %90 : vector<8x32xf32> to vector<8x32xbf16>
    %92 = vector.extract_strided_slice %5 {offsets = [96, 0], sizes = [32, 128], strides = [1, 1]} : vector<128x128xbf16> to vector<32x128xbf16>
    %cst_30 = arith.constant dense<0.000000e+00> : vector<8x128xf32>
    %93 = tpu.matmul %91, %92, %cst_30 {dimension_numbers = #tpu.dot_dimension_numbers<[1], [0], [0], [1], [0, 0, 1, 1], [], []>} : vector<8x32xbf16>, vector<32x128xbf16>, vector<8x128xf32> -> vector<8x128xf32>
    %94 = arith.addf %72, %93 : vector<8x128xf32>
    %c0_31 = arith.constant 0 : index
    %c0_32 = arith.constant 0 : index
    %95 = vector.load %arg4[%c0_31, %c0_32] : memref<1x128xf32, #tpu.memory_space<vmem>>, vector<1x128xf32>
    %96 = vector.broadcast %95 : vector<1x128xf32> to vector<8x128xf32>
    %97 = arith.addf %94, %96 : vector<8x128xf32>
    %c0_33 = arith.constant 0 : index
    %c0_34 = arith.constant 0 : index
    %c0_35 = arith.constant 0 : index
    %98 = vector.load %arg5[%c0_33, %c0_34, %c0_35] : memref<1x8x128xf32, #tpu.memory_space<vmem>>, vector<1x8x128xf32>
    %99 = vector.shape_cast %98 : vector<1x8x128xf32> to vector<8x128xf32>
    %100 = vector.shape_cast %97 : vector<8x128xf32> to vector<1x8x128xf32>
    tpu.vector_store %arg5[%c0_33, %c0_34, %c0_35], %100 {strides = array<i32>} : memref<1x8x128xf32, #tpu.memory_space<vmem>>, vector<1x8x128xf32>,
    return
  }
  func.func @transform_0(%arg0: i32) -> (i32, i32, i32) {
    %c0_i32 = arith.constant 0 : i32
    %c0_i32_0 = arith.constant 0 : i32
    %c0_i32_1 = arith.constant 0 : i32
    return %arg0, %c0_i32, %c0_i32_0 : i32, i32, i32
  }
  func.func @transform_1(%arg0: i32) -> (i32, i32) {
    %c0_i32 = arith.constant 0 : i32
    %c0_i32_0 = arith.constant 0 : i32
    %c0_i32_1 = arith.constant 0 : i32
    return %c0_i32, %c0_i32_0 : i32, i32
  }
  func.func @transform_2(%arg0: i32) -> (i32, i32) {
    %c0_i32 = arith.constant 0 : i32
    %c0_i32_0 = arith.constant 0 : i32
    %c0_i32_1 = arith.constant 0 : i32
    return %c0_i32, %c0_i32_0 : i32, i32
  }
  func.func @transform_3(%arg0: i32) -> (i32, i32) {
    %c0_i32 = arith.constant 0 : i32
    %c0_i32_0 = arith.constant 0 : i32
    %c0_i32_1 = arith.constant 0 : i32
    return %c0_i32, %c0_i32_0 : i32, i32
  }
  func.func @transform_4(%arg0: i32) -> (i32, i32, i32) {
    %c0_i32 = arith.constant 0 : i32
    %c0_i32_0 = arith.constant 0 : i32
    %c0_i32_1 = arith.constant 0 : i32
    return %arg0, %c0_i32, %c0_i32_0 : i32, i32, i32
  }
}

</mosaic_0001>

<llo_original>
// kernel: tpu_custom_call.1
$region0: #{tpu_custom_call.1}
  #allocation0 [shape = 'u32[]', space=smem, size = 0x4, offset = 0x4, fixed_abs, tag = 'smem constant byte address 0x4 - core index']
  #allocation1 [shape = 'u32[144,128]{1,0:T(1,128)}', space=vmem, size = 0x12000, scoped, tag = 'internal scratch']
  %s0 = inlined_call_operand.hbm [shape: bf16[2,8,128], index: 0, kind: input, shape index: {}]
  %s1 = inlined_call_operand.hbm [shape: bf16[128,384], index: 1, kind: input, shape index: {}]
  %s2 = inlined_call_operand.hbm [shape: bf16[128,128], index: 2, kind: input, shape index: {}]
  %s3 = inlined_call_operand.vmem [shape: f32[1,128], index: 3, kind: input, shape index: {}]
  %s4 = inlined_call_operand.hbm [shape: f32[2,8,128], index: 4, kind: output, shape index: {}]
  %s5 = sld [smem:[#allocation0]]
  $region61: #{tpu_custom_call.1} parent=0
    _
  %s7 = ssub.s32 1, %s5
  %s8 = scalar_select 0, %s7, %s5
  $region1: #{tpu_custom_call.1} parent=0
    #allocation2 [shape = 'u8[4096]{0}', space=vmem, size = 0x1000, scoped, tag = 'input window, operand 0']
    #allocation3 [shape = 's32[2]{0}', space=sflag, size = 0x8, scoped, tag = 'scoped memory for tpu_custom_call.1']
    #allocation4 [shape = 's32[2]{0}', space=sflag, size = 0x8, scoped, tag = 'scoped memory for tpu_custom_call.1']
    #allocation5 [shape = 'u8[98304]{0}', space=vmem, size = 0x18000, scoped, tag = 'input window, operand 1, single buffered']
    #allocation6 [shape = 's32[1]{0}', space=sflag, size = 0x4, scoped, tag = 'scoped memory for tpu_custom_call.1']
    #allocation7 [shape = 'u8[32768]{0}', space=vmem, size = 0x8000, scoped, tag = 'input window, operand 2, single buffered']
    #allocation8 [shape = 'u8[8192]{0}', space=vmem, size = 0x2000, scoped, tag = 'output window, operand 0']
    %9 = vsyncpa [#allocation3], 0
    %s10 = scalar_lea.sflag [#allocation3], 1
    %11 = vsyncpa %s10, 0
    %12 = vsyncpa [#allocation6], 0
    %13 = vsyncpa [#allocation4], 0
    %s14 = scalar_lea.sflag [#allocation4], 1
    %15 = vsyncpa %s14, 0
    loop: start=0, step=1, limit=4
    $region2: #{tpu_custom_call.1} parent=1 // loop_pre_header
      _
    $region3: #{tpu_custom_call.1} parent=1 // loop_header
      %s17 = sphi 0, %s21
      %p18 = scmp.ge.s32.totalorder %s17, 4
      %s27 = sphi 0, %s29
      %s30 = sphi 0, %s27
      %s31 = sphi 0, %s30
      %s47 = sphi 0, %s31
      %s51 = sphi 0, %s51
      %s53 = sphi 0, %s51
      %s54 = sphi 0, %s53
      %s68 = sphi 0, %s54
      %s72 = sphi 0, %s72
      %s74 = sphi 0, %s72
      %s75 = sphi 0, %s74
      %s89 = sphi 0, %s75
      %s93 = sphi 0, %s93
      %s95 = sphi 0, %s93
      %s96 = sphi 0, %s95
      %s110 = sphi 0, %s96
      %s116 = sphi 0, %s118
      %s119 = sphi 0, %s116
      %s120 = sphi 0, %s119
      %s136 = sphi 0, %s120
    $region4: #{tpu_custom_call.1} parent=1 // loop_header_branch
      %20 = sbr.rel (%p18) target = $region8
    $region5: #{tpu_custom_call.1} parent=1 // loop_body
      %s22 = ssub.s32 %s17, 1
      %s23 = ssub.s32 %s17, 2
      %s24 = sadd.s32 %s17, 1
      %s25 = ssub.s32 %s17, %s24
      %p26 = scmp.eq.s32.totalorder %s25, 0
      %s28 = sadd.s32 %s27, 1
      %s29 = scalar_select %p26, %s27, %s28
      %p32 = pneg %p26
      %p33 = scmp.eq.s32.totalorder %s17, 1
      %p34 = por %p32, %p33
      %p35 = scmp.ne.s32.totalorder %s27, %s30
      %p36 = scmp.eq.s32.totalorder %s17, 0
      %p37 = por %p35, %p36
      %p38 = scmp.ne.s32.totalorder %s27, %s30
      %p39 = scmp.eq.s32.totalorder %s22, 1
      %p40 = por %p38, %p39
      %p41 = scmp.ne.s32.totalorder %s30, %s31
      %p42 = scmp.eq.s32.totalorder %s22, 0
      %p43 = por %p41, %p42
      %p44 = scmp.ne.s32.totalorder %s30, %s31
      %p45 = scmp.eq.s32.totalorder %s23, 1
      %p46 = por %p44, %p45
      %p48 = scmp.ne.s32.totalorder %s31, %s47
      %p49 = scmp.eq.s32.totalorder %s23, 0
      %p50 = por %p48, %p49
      %s52 = sadd.s32 %s51, 1
      %p55 = scmp.eq.s32.totalorder %s17, 1
      %p56 = scmp.ne.s32.totalorder %s51, %s53
      %p57 = scmp.eq.s32.totalorder %s17, 0
      %p58 = por %p56, %p57
      %p59 = scmp.ne.s32.totalorder %s51, %s53
      %p60 = scmp.eq.s32.totalorder %s22, 1
      %p61 = por %p59, %p60
      %p62 = scmp.ne.s32.totalorder %s53, %s54
      %p63 = scmp.eq.s32.totalorder %s22, 0
      %p64 = por %p62, %p63
      %p65 = scmp.ne.s32.totalorder %s53, %s54
      %p66 = scmp.eq.s32.totalorder %s23, 1
      %p67 = por %p65, %p66
      %p69 = scmp.ne.s32.totalorder %s54, %s68
      %p70 = scmp.eq.s32.totalorder %s23, 0
      %p71 = por %p69, %p70
      %s73 = sadd.s32 %s72, 1
      %p76 = scmp.eq.s32.totalorder %s17, 1
      %p77 = scmp.ne.s32.totalorder %s72, %s74
      %p78 = scmp.eq.s32.totalorder %s17, 0
      %p79 = por %p77, %p78
      %p80 = scmp.ne.s32.totalorder %s72, %s74
      %p81 = scmp.eq.s32.totalorder %s22, 1
      %p82 = por %p80, %p81
      %p83 = scmp.ne.s32.totalorder %s74, %s75
      %p84 = scmp.eq.s32.totalorder %s22, 0
      %p85 = por %p83, %p84
      %p86 = scmp.ne.s32.totalorder %s74, %s75
      %p87 = scmp.eq.s32.totalorder %s23, 1
      %p88 = por %p86, %p87
      %p90 = scmp.ne.s32.totalorder %s75, %s89
      %p91 = scmp.eq.s32.totalorder %s23, 0
      %p92 = por %p90, %p91
      %s94 = sadd.s32 %s93, 1
      %p97 = scmp.eq.s32.totalorder %s17, 1
      %p98 = scmp.ne.s32.totalorder %s93, %s95
      %p99 = scmp.eq.s32.totalorder %s17, 0
      %p100 = por %p98, %p99
      %p101 = scmp.ne.s32.totalorder %s93, %s95
      %p102 = scmp.eq.s32.totalorder %s22, 1
      %p103 = por %p101, %p102
      %p104 = scmp.ne.s32.totalorder %s95, %s96
      %p105 = scmp.eq.s32.totalorder %s22, 0
      %p106 = por %p104, %p105
      %p107 = scmp.ne.s32.totalorder %s95, %s96
      %p108 = scmp.eq.s32.totalorder %s23, 1
      %p109 = por %p107, %p108
      %p111 = scmp.ne.s32.totalorder %s96, %s110
      %p112 = scmp.eq.s32.totalorder %s23, 0
      %p113 = por %p111, %p112
      %s114 = ssub.s32 %s17, %s24
      %p115 = scmp.eq.s32.totalorder %s114, 0
      %s117 = sadd.s32 %s116, 1
      %s118 = scalar_select %p115, %s116, %s117
      %p121 = pneg %p115
      %p122 = scmp.eq.s32.totalorder %s17, 1
      %p123 = por %p121, %p122
      %p124 = scmp.ne.s32.totalorder %s116, %s119
      %p125 = scmp.eq.s32.totalorder %s17, 0
      %p126 = por %p124, %p125
      %p127 = scmp.ne.s32.totalorder %s116, %s119
      %p128 = scmp.eq.s32.totalorder %s22, 1
      %p129 = por %p127, %p128
      %p130 = scmp.ne.s32.totalorder %s119, %s120
      %p131 = scmp.eq.s32.totalorder %s22, 0
      %p132 = por %p130, %p131
      %p133 = scmp.ne.s32.totalorder %s119, %s120
      %p134 = scmp.eq.s32.totalorder %s23, 1
      %p135 = por %p133, %p134
      %p137 = scmp.ne.s32.totalorder %s120, %s136
      %p138 = scmp.eq.s32.totalorder %s23, 0
      %p139 = por %p137, %p138
      %p140 = scmp.le.s32.totalorder 1, %s17
      %p141 = scmp.lt.s32.totalorder %s17, 3
      %p142 = pnand %p140, %p141
      %p143 = pneg %p142
      // Predicated region
      $region9: #{tpu_custom_call.1} parent=5 // pred_check
        _
      $region10: #{tpu_custom_call.1} parent=5 // pred_check_branch
        %145 = sbr.rel (%p142) target = $region12
      $region11: #{tpu_custom_call.1} parent=5 // pred_region
        %s146 = ssub.s32 %s17, 1
        // Predicated region
        $region13: #{tpu_custom_call.1} parent=11 // pred_check
          %p147 = pneg %p64
        $region14: #{tpu_custom_call.1} parent=11 // pred_check_branch
          %149 = sbr.rel (%p147) target = $region16
        $region15: #{tpu_custom_call.1} parent=11 // pred_region
          %s151 = ssub.s32 3072, 3072
          %152 = vsyncadd [#allocation6], %s151
          %s153 = sshll.u32 [#allocation5], 4
          %s154 = int_to_ptr.vmem [resolvable:$true] %s153
          %159 = dma.hbm_to_vmem [thread:$0]  %s1, 3072, %s154, [#allocation6], 192, 192, 12
        $region16: #{tpu_custom_call.1} parent=11 // pred_fallthru
          _
        // Predicated region
        $region17: #{tpu_custom_call.1} parent=11 // pred_check
          %p160 = pneg %p85
        $region18: #{tpu_custom_call.1} parent=11 // pred_check_branch
          %162 = sbr.rel (%p160) target = $region20
        $region19: #{tpu_custom_call.1} parent=11 // pred_region
          %s164 = ssub.s32 1024, 1024
          %165 = vsyncadd [#allocation6], %s164
          %s166 = sshll.u32 [#allocation7], 4
          %s167 = int_to_ptr.vmem [resolvable:$true] %s166
          %172 = dma.hbm_to_vmem [thread:$0]  %s2, 1024, %s167, [#allocation6], 64, 64, 4
        $region20: #{tpu_custom_call.1} parent=11 // pred_fallthru
          _
        // Predicated region
        $region21: #{tpu_custom_call.1} parent=11 // pred_check
          %p173 = pneg %p106
        $region22: #{tpu_custom_call.1} parent=11 // pred_check_branch
          %175 = sbr.rel (%p173) target = $region24
        $region23: #{tpu_custom_call.1} parent=11 // pred_region
          _
        $region24: #{tpu_custom_call.1} parent=11 // pred_fallthru
          _
      $region12: #{tpu_custom_call.1} parent=5 // pred_fallthru
        _
      %p176 = scmp.lt.s32.totalorder %s17, 2
      // Predicated region
      $region25: #{tpu_custom_call.1} parent=5 // pred_check
        %p177 = pneg %p176
      $region26: #{tpu_custom_call.1} parent=5 // pred_check_branch
        %179 = sbr.rel (%p177) target = $region28
      $region27: #{tpu_custom_call.1} parent=5 // pred_region
        // Predicated region
        $region29: #{tpu_custom_call.1} parent=27 // pred_check
          %p180 = pneg %p37
        $region30: #{tpu_custom_call.1} parent=27 // pred_check_branch
          %182 = sbr.rel (%p180) target = $region32
        $region31: #{tpu_custom_call.1} parent=27 // pred_region
          %s183 = sand.u32 %s27, 1
          %s184 = scalar_lea.sflag [#allocation3], %s183
          %s185 = sand.u32 %s27, 1
          %s186 = smul.addr %s185, 4
          %s187 = scalar_lea.vmem [#allocation2], %s186
          %s189 = ssub.s32 64, 64
          %190 = vsyncadd %s184, %s189
          %s191 = smul.addr %s17, 64
          %s192 = scalar_lea.hbm %s0, %s191
          %s194 = sshll.u32 %s187, 4
          %s195 = int_to_ptr.vmem [resolvable:$true] %s194
          %197 = dma.hbm_to_vmem [thread:$0]  %s192, 64, %s195, %s184
        $region32: #{tpu_custom_call.1} parent=27 // pred_fallthru
          _
      $region28: #{tpu_custom_call.1} parent=5 // pred_fallthru
        _
      %p198 = scmp.le.s32.totalorder 1, %s17
      %p199 = scmp.lt.s32.totalorder %s17, 3
      %p200 = pnand %p198, %p199
      %p201 = pneg %p200
      // Predicated region
      $region33: #{tpu_custom_call.1} parent=5 // pred_check
        _
      $region34: #{tpu_custom_call.1} parent=5 // pred_check_branch
        %203 = sbr.rel (%p200) target = $region36
      $region35: #{tpu_custom_call.1} parent=5 // pred_region
        %s204 = ssub.s32 %s17, 1
        %s205 = sand.u32 %s30, 1
        %s206 = scalar_lea.sflag [#allocation3], %s205
        %s207 = sand.u32 %s30, 1
        %s208 = smul.addr %s207, 4
        %s209 = scalar_lea.vmem [#allocation2], %s208
        // Predicated region
        $region37: #{tpu_custom_call.1} parent=35 // pred_check
          %p210 = pneg %p43
        $region38: #{tpu_custom_call.1} parent=35 // pred_check_branch
          %212 = sbr.rel (%p210) target = $region40
        $region39: #{tpu_custom_call.1} parent=35 // pred_region
          %213 = dma.done %s206, 64
        $region40: #{tpu_custom_call.1} parent=35 // pred_fallthru
          _
        // Predicated region
        $region41: #{tpu_custom_call.1} parent=35 // pred_check
          %p214 = pneg %p64
        $region42: #{tpu_custom_call.1} parent=35 // pred_check_branch
          %216 = sbr.rel (%p214) target = $region44
        $region43: #{tpu_custom_call.1} parent=35 // pred_region
          %217 = dma.done [#allocation6], 3072
        $region44: #{tpu_custom_call.1} parent=35 // pred_fallthru
          _
        // Predicated region
        $region45: #{tpu_custom_call.1} parent=35 // pred_check
          %p218 = pneg %p85
        $region46: #{tpu_custom_call.1} parent=35 // pred_check_branch
          %220 = sbr.rel (%p218) target = $region48
        $region47: #{tpu_custom_call.1} parent=35 // pred_region
          %221 = dma.done [#allocation6], 1024
        $region48: #{tpu_custom_call.1} parent=35 // pred_fallthru
          _
        %s222 = sand.u32 %s30, 1
        %s223 = scalar_lea.sflag [#allocation3], %s222
        %s224 = sand.u32 %s30, 1
        %s225 = smul.addr %s224, 4
        %s226 = scalar_lea.vmem [#allocation2], %s225
        %p227 = pneg %p43
        %p228 = pneg %p40
        %p229 = pneg %p64
        %p230 = pneg %p61
        %p231 = pneg %p85
        %p232 = pneg %p82
        %p233 = pneg %p106
        %p234 = pneg %p103
        %p235 = pneg %p132
        %p236 = pneg %p129
        %s237 = sand.u32 %s119, 1
        %s238 = scalar_lea.sflag [#allocation4], %s237
        %s239 = sand.u32 %s119, 1
        %s240 = smul.addr %s239, 8
        %s241 = scalar_lea.vmem [#allocation8], %s240
        %v243 = vld [vmem:[%s209] sm:$0xf]
        %v244 = vld [vmem:[#allocation5] sm:$0xff]
        %v245 = vld [vmem:[#allocation5 + $0x8] sm:$0xf]
        %v246 = vld [vmem:[#allocation5 + $0xc] sm:$0xff]
        %v247 = vld [vmem:[#allocation5 + $0x14] sm:$0xf]
        %v248 = vld [vmem:[#allocation5 + $0x18] sm:$0xff]
        %v249 = vld [vmem:[#allocation5 + $0x20] sm:$0xf]
        %v250 = vld [vmem:[#allocation5 + $0x24] sm:$0xff]
        %v251 = vld [vmem:[#allocation5 + $0x2c] sm:$0xf]
        %v252 = vld [vmem:[#allocation5 + $0x30] sm:$0xff]
        %v253 = vld [vmem:[#allocation5 + $0x38] sm:$0xf]
        %v254 = vld [vmem:[#allocation5 + $0x3c] sm:$0xff]
        %v255 = vld [vmem:[#allocation5 + $0x44] sm:$0xf]
        %v256 = vld [vmem:[#allocation5 + $0x48] sm:$0xff]
        %v257 = vld [vmem:[#allocation5 + $0x50] sm:$0xf]
        %v258 = vld [vmem:[#allocation5 + $0x54] sm:$0xff]
        %v259 = vld [vmem:[#allocation5 + $0x5c] sm:$0xf]
        %v260 = vld [vmem:[#allocation5 + $0x60] sm:$0xff]
        %v261 = vld [vmem:[#allocation5 + $0x68] sm:$0xf]
        %v262 = vld [vmem:[#allocation5 + $0x6c] sm:$0xff]
        %v263 = vld [vmem:[#allocation5 + $0x74] sm:$0xf]
        %v264 = vld [vmem:[#allocation5 + $0x78] sm:$0xff]
        %v265 = vld [vmem:[#allocation5 + $0x80] sm:$0xf]
        %v266 = vld [vmem:[#allocation5 + $0x84] sm:$0xff]
        %v267 = vld [vmem:[#allocation5 + $0x8c] sm:$0xf]
        %v268 = vld [vmem:[#allocation5 + $0x90] sm:$0xff]
        %v269 = vld [vmem:[#allocation5 + $0x98] sm:$0xf]
        %v270 = vld [vmem:[#allocation5 + $0x9c] sm:$0xff]
        %v271 = vld [vmem:[#allocation5 + $0xa4] sm:$0xf]
        %v272 = vld [vmem:[#allocation5 + $0xa8] sm:$0xff]
        %v273 = vld [vmem:[#allocation5 + $0xb0] sm:$0xf]
        %v274 = vld [vmem:[#allocation5 + $0xb4] sm:$0xff]
        %v275 = vld [vmem:[#allocation5 + $0xbc] sm:$0xf]
        %v308 = vunpack.c.l.b16 %v244
        %v309 = vunpack.c.h.b16 %v244
        %v310 = vunpack.c.l.b16 %v245
        %v311 = vunpack.c.l.b16 %v246
        %v312 = vunpack.c.h.b16 %v246
        %v313 = vunpack.c.l.b16 %v247
        %v314 = vunpack.c.l.b16 %v248
        %v315 = vunpack.c.h.b16 %v248
        %v316 = vunpack.c.l.b16 %v249
        %v317 = vunpack.c.l.b16 %v250
        %v318 = vunpack.c.h.b16 %v250
        %v319 = vunpack.c.l.b16 %v251
        %v320 = vunpack.c.l.b16 %v252
        %v321 = vunpack.c.h.b16 %v252
        %v322 = vunpack.c.l.b16 %v253
        %v323 = vunpack.c.l.b16 %v254
        %v324 = vunpack.c.h.b16 %v254
        %v325 = vunpack.c.l.b16 %v255
        %v326 = vunpack.c.l.b16 %v256
        %v327 = vunpack.c.h.b16 %v256
        %v328 = vunpack.c.l.b16 %v257
        %v329 = vunpack.c.l.b16 %v258
        %v330 = vunpack.c.h.b16 %v258
        %v331 = vunpack.c.l.b16 %v259
        %v332 = vunpack.c.l.b16 %v260
        %v333 = vunpack.c.h.b16 %v260
        %v334 = vunpack.c.l.b16 %v261
        %v335 = vunpack.c.l.b16 %v262
        %v336 = vunpack.c.h.b16 %v262
        %v337 = vunpack.c.l.b16 %v263
        %v338 = vunpack.c.l.b16 %v264
        %v339 = vunpack.c.h.b16 %v264
        %v340 = vunpack.c.l.b16 %v265
        %v341 = vunpack.c.l.b16 %v266
        %v342 = vunpack.c.h.b16 %v266
        %v343 = vunpack.c.l.b16 %v267
        %v344 = vunpack.c.l.b16 %v268
        %v345 = vunpack.c.h.b16 %v268
        %v346 = vunpack.c.l.b16 %v269
        %v347 = vunpack.c.l.b16 %v270
        %v348 = vunpack.c.h.b16 %v270
        %v349 = vunpack.c.l.b16 %v271
        %v350 = vunpack.c.l.b16 %v272
        %v351 = vunpack.c.h.b16 %v272
        %v352 = vunpack.c.l.b16 %v273
        %v353 = vunpack.c.l.b16 %v274
        %v354 = vunpack.c.h.b16 %v274
        %v355 = vunpack.c.l.b16 %v275
        %v356 = vpack.c.b16 %v311, %v308
        %v357 = vpack.c.b16 %v312, %v309
        %v358 = vpack.c.b16 %v313, %v310
        %v359 = vpack.c.b16 %v317, %v314
        %v360 = vpack.c.b16 %v318, %v315
        %v361 = vpack.c.b16 %v319, %v316
        %v362 = vpack.c.b16 %v323, %v320
        %v363 = vpack.c.b16 %v324, %v321
        %v364 = vpack.c.b16 %v325, %v322
        %v365 = vpack.c.b16 %v329, %v326
        %v366 = vpack.c.b16 %v330, %v327
        %v367 = vpack.c.b16 %v331, %v328
        %v368 = vpack.c.b16 %v335, %v332
        %v369 = vpack.c.b16 %v336, %v333
        %v370 = vpack.c.b16 %v337, %v334
        %v371 = vpack.c.b16 %v341, %v338
        %v372 = vpack.c.b16 %v342, %v339
        %v373 = vpack.c.b16 %v343, %v340
        %v374 = vpack.c.b16 %v347, %v344
        %v375 = vpack.c.b16 %v348, %v345
        %v376 = vpack.c.b16 %v349, %v346
        %v377 = vpack.c.b16 %v353, %v350
        %v378 = vpack.c.b16 %v354, %v351
        %v379 = vpack.c.b16 %v355, %v352
        %404 = vmatprep.subr.bf16.mxu0 %v357
        %405 = vmatpush1.bf16.msra.mxu0 %v356
        %406 = vmatprep.subr.bf16.mxu0 %v360
        %407 = vmatpush1.bf16.msra.mxu0 %v359
        %408 = vmatprep.subr.bf16.mxu0 %v363
        %409 = vmatpush1.bf16.msra.mxu0 %v362
        %410 = vmatprep.subr.bf16.mxu0 %v366
        %411 = vmatpush1.bf16.msra.mxu0 %v365
        %412 = vmatprep.subr.bf16.mxu0 %v369
        %413 = vmatpush1.bf16.msra.mxu0 %v368
        %414 = vmatprep.subr.bf16.mxu0 %v372
        %415 = vmatpush1.bf16.msra.mxu0 %v371
        %416 = vmatprep.subr.bf16.mxu0 %v375
        %417 = vmatpush1.bf16.msra.mxu0 %v374
        %418 = vmatprep.subr.bf16.mxu0 %v378
        %419 = vmatpush1.bf16.msra.mxu0 %v377
        %420 = vmatprep.subr.bf16.mxu0 0
        %421 = vmatpush1.bf16.msra.mxu0 0
        %422 = vmatprep.subr.bf16.mxu0 0
        %423 = vmatpush1.bf16.msra.mxu0 0
        %424 = vmatprep.subr.bf16.mxu0 0
        %425 = vmatpush1.bf16.msra.mxu0 0
        %426 = vmatprep.subr.bf16.mxu0 0
        %427 = vmatpush1.bf16.msra.mxu0 0
        %428 = vmatprep.subr.bf16.mxu0 0
        %429 = vmatpush1.bf16.msra.mxu0 0
        %430 = vmatprep.subr.bf16.mxu0 0
        %431 = vmatpush1.bf16.msra.mxu0 0
        %432 = vmatprep.subr.bf16.mxu0 0
        %433 = vmatpush1.bf16.msra.mxu0 0
        %434 = vmatprep.subr.bf16.mxu0 0
        %435 = vmatpush1.bf16.msra.mxu0 0
        %436 = vmatprep.mubr.bf16.mxu0 0
        %437 = vmatmul.mubr.bf16.gmra.mrb[0].mxu0 %v243
        %v438 = vpop.f32.mrb[0].mxu0
        %v439 = vadd.f32 0.0, %v438
        %v440 = vpop.f32.mrb[0].mxu0
        %v441 = vadd.f32 0.0, %v440
        %v442 = vpop.f32.mrb[0].mxu0
        %v443 = vpop.f32.mrb[0].mxu0
        %444 = vdwg.mxu0
        %445 = vmatprep.subr.bf16.mxu0 0
        %446 = vmatpush1.bf16.msra.mxu0 %v358
        %447 = vmatprep.subr.bf16.mxu0 0
        %448 = vmatpush1.bf16.msra.mxu0 %v361
        %449 = vmatprep.subr.bf16.mxu0 0
        %450 = vmatpush1.bf16.msra.mxu0 %v364
        %451 = vmatprep.subr.bf16.mxu0 0
        %452 = vmatpush1.bf16.msra.mxu0 %v367
        %453 = vmatprep.subr.bf16.mxu0 0
        %454 = vmatpush1.bf16.msra.mxu0 %v370
        %455 = vmatprep.subr.bf16.mxu0 0
        %456 = vmatpush1.bf16.msra.mxu0 %v373
        %457 = vmatprep.subr.bf16.mxu0 0
        %458 = vmatpush1.bf16.msra.mxu0 %v376
        %459 = vmatprep.subr.bf16.mxu0 0
        %460 = vmatpush1.bf16.msra.mxu0 %v379
        %461 = vmatprep.subr.bf16.mxu0 0
        %462 = vmatpush1.bf16.msra.mxu0 0
        %463 = vmatprep.subr.bf16.mxu0 0
        %464 = vmatpush1.bf16.msra.mxu0 0
        %465 = vmatprep.subr.bf16.mxu0 0
        %466 = vmatpush1.bf16.msra.mxu0 0
        %467 = vmatprep.subr.bf16.mxu0 0
        %468 = vmatpush1.bf16.msra.mxu0 0
        %469 = vmatprep.subr.bf16.mxu0 0
        %470 = vmatpush1.bf16.msra.mxu0 0
        %471 = vmatprep.subr.bf16.mxu0 0
        %472 = vmatpush1.bf16.msra.mxu0 0
        %473 = vmatprep.subr.bf16.mxu0 0
        %474 = vmatpush1.bf16.msra.mxu0 0
        %475 = vmatprep.subr.bf16.mxu0 0
        %476 = vmatpush1.bf16.msra.mxu0 0
        %477 = vmatprep.mubr.bf16.mxu0 0
        %478 = vmatmul.mubr.bf16.gmra.mrb[0].mxu0 %v243
        %v479 = vpop.f32.mrb[0].mxu0
        %v480 = vadd.f32 0.0, %v479
        %v481 = vpop.f32.mrb[0].mxu0
        %v482 = vpop.f32.mrb[0].mxu0
        %v483 = vpop.f32.mrb[0].mxu0
        %484 = vdwg.mxu0
        %v485 = vpack.c.bf16 %v439, %v439
        %v486 = vpack.c.bf16 %v441, %v441
        %v487 = vpack.c.bf16 %v480, %v480
        %v488 = vld [vmem:[#allocation7] sm:$0xf]
        %v489 = vld [vmem:[#allocation7 + $0x4] sm:$0xf]
        %v490 = vld [vmem:[#allocation7 + $0x8] sm:$0xf]
        %v491 = vld [vmem:[#allocation7 + $0xc] sm:$0xf]
        %v492 = vld [vmem:[#allocation7 + $0x10] sm:$0xf]
        %v493 = vld [vmem:[#allocation7 + $0x14] sm:$0xf]
        %v494 = vld [vmem:[#allocation7 + $0x18] sm:$0xf]
        %v495 = vld [vmem:[#allocation7 + $0x1c] sm:$0xf]
        %v496 = vld [vmem:[#allocation7 + $0x20] sm:$0xf]
        %v497 = vld [vmem:[#allocation7 + $0x24] sm:$0xf]
        %v498 = vld [vmem:[#allocation7 + $0x28] sm:$0xf]
        %v499 = vld [vmem:[#allocation7 + $0x2c] sm:$0xf]
        %v500 = vld [vmem:[#allocation7 + $0x30] sm:$0xf]
        %v501 = vld [vmem:[#allocation7 + $0x34] sm:$0xf]
        %v502 = vld [vmem:[#allocation7 + $0x38] sm:$0xf]
        %v503 = vld [vmem:[#allocation7 + $0x3c] sm:$0xf]
        %vm504 = vcmask 261120
        %v506 = vsel %vm504, %v485, 0
        %v509 = vsel %vm504, %v486, 0
        %511 = vmatprep.subr.bf16.mxu0 0
        %512 = vmatpush1.bf16.xpose.msra.mxu0 %v509
        %513 = vmatprep.subr.bf16.mxu0 0
        %514 = vmatpush1.bf16.xpose.msra.mxu0 0
        %515 = vmatprep.subr.bf16.mxu0 0
        %516 = vmatpush1.bf16.xpose.msra.mxu0 0
        %517 = vmatprep.subr.bf16.mxu0 0
        %518 = vmatpush1.bf16.xpose.msra.mxu0 0
        %519 = vmatprep.subr.bf16.mxu0 0
        %520 = vmatpush1.bf16.xpose.msra.mxu0 0
        %521 = vmatprep.subr.bf16.mxu0 0
        %522 = vmatpush1.bf16.xpose.msra.mxu0 0
        %523 = vmatprep.subr.bf16.mxu0 0
        %524 = vmatpush1.bf16.xpose.msra.mxu0 0
        %525 = vmatprep.subr.bf16.mxu0 0
        %526 = vmatpush1.bf16.xpose.msra.mxu0 0
        %527 = vmatprep.subr.bf16.mxu0 0
        %528 = vmatpush1.bf16.xpose.msra.mxu0 0
        %529 = vmatprep.subr.bf16.mxu0 0
        %530 = vmatpush1.bf16.xpose.msra.mxu0 0
        %531 = vmatprep.subr.bf16.mxu0 0
        %532 = vmatpush1.bf16.xpose.msra.mxu0 0
        %533 = vmatprep.subr.bf16.mxu0 0
        %534 = vmatpush1.bf16.xpose.msra.mxu0 0
        %535 = vmatprep.subr.bf16.mxu0 0
        %536 = vmatpush1.bf16.xpose.msra.mxu0 0
        %537 = vmatprep.subr.bf16.mxu0 0
        %538 = vmatpush1.bf16.xpose.msra.mxu0 0
        %539 = vmatprep.subr.bf16.mxu0 0
        %540 = vmatpush1.bf16.xpose.msra.mxu0 0
        %541 = vmatprep.subr.bf16.mxu0 0
        %542 = vmatpush1.bf16.xpose.msra.mxu0 0
        %543 = vmatprep.mubr.bf16.mxu0 0
        %544 = vmatmul.mubr.bf16.gmra.mrb[0].mxu0 %v506
        %v545 = vpop.f32.mrb[0].mxu0
        %v546 = vadd.f32 0.0, %v545
        %v547 = vpop.f32.mrb[0].mxu0
        %v548 = vpop.f32.mrb[0].mxu0
        %v549 = vpop.f32.mrb[0].mxu0
        %550 = vdwg.mxu0
        %v551 = vmul.f32 %v546, 0.088388346
        %vm552 = vcmask 64512
        %v553 = vsel %vm552, %v551, -inf
        %554 = vmax.xlane.f32.xlu0 %v553
        %v555 = vpop.xlane.xlu0 %554
        %v556 = vsub.f32 %v551, %v555
        %v557 = vmul.f32 %v556, 1.442695
        %v558 = vpow.pop %v557
        %v559 = vsel %vm552, %v558, 0.0
        %560 = vadd.xlane.f32.xlu0 %v559
        %v561 = vpop.xlane.xlu0 %560
        %v562 = vrcp.pop %v561
        %v563 = vmul.f32 %v558, %v562
        %v564 = vpack.c.bf16 %v563, %v563
        %v566 = vsel %vm552, %v564, 0
        %vm568 = vcmask 1043456
        %v570 = vsel %vm568, %v487, 0
        %572 = vmatprep.subr.bf16.mxu0 0
        %573 = vmatpush1.bf16.msra.mxu0 %v570
        %574 = vmatprep.subr.bf16.mxu0 0
        %575 = vmatpush1.bf16.msra.mxu0 0
        %576 = vmatprep.subr.bf16.mxu0 0
        %577 = vmatpush1.bf16.msra.mxu0 0
        %578 = vmatprep.subr.bf16.mxu0 0
        %579 = vmatpush1.bf16.msra.mxu0 0
        %580 = vmatprep.subr.bf16.mxu0 0
        %581 = vmatpush1.bf16.msra.mxu0 0
        %582 = vmatprep.subr.bf16.mxu0 0
        %583 = vmatpush1.bf16.msra.mxu0 0
        %584 = vmatprep.subr.bf16.mxu0 0
        %585 = vmatpush1.bf16.msra.mxu0 0
        %586 = vmatprep.subr.bf16.mxu0 0
        %587 = vmatpush1.bf16.msra.mxu0 0
        %588 = vmatprep.subr.bf16.mxu0 0
        %589 = vmatpush1.bf16.msra.mxu0 0
        %590 = vmatprep.subr.bf16.mxu0 0
        %591 = vmatpush1.bf16.msra.mxu0 0
        %592 = vmatprep.subr.bf16.mxu0 0
        %593 = vmatpush1.bf16.msra.mxu0 0
        %594 = vmatprep.subr.bf16.mxu0 0
        %595 = vmatpush1.bf16.msra.mxu0 0
        %596 = vmatprep.subr.bf16.mxu0 0
        %597 = vmatpush1.bf16.msra.mxu0 0
        %598 = vmatprep.subr.bf16.mxu0 0
        %599 = vmatpush1.bf16.msra.mxu0 0
        %600 = vmatprep.subr.bf16.mxu0 0
        %601 = vmatpush1.bf16.msra.mxu0 0
        %602 = vmatprep.subr.bf16.mxu0 0
        %603 = vmatpush1.bf16.msra.mxu0 0
        %604 = vmatprep.mubr.bf16.mxu0 0
        %605 = vmatmul.mubr.bf16.gmra.mrb[0].mxu0 %v566
        %v606 = vpop.f32.mrb[0].mxu0
        %v607 = vadd.f32 0.0, %v606
        %v608 = vpop.f32.mrb[0].mxu0
        %v609 = vpop.f32.mrb[0].mxu0
        %v610 = vpop.f32.mrb[0].mxu0
        %611 = vdwg.mxu0
        %v612 = vpack.c.bf16 %v607, %v607
        %614 = vrot.lane.b32.xlu0 %v485, 96
        %v615 = vpop.permute.xlu0 %614
        %617 = vrot.lane.b32.xlu0 %v486, 96
        %v618 = vpop.permute.xlu0 %617
        %v620 = vsel %vm504, %v615, 0
        %v623 = vsel %vm504, %v618, 0
        %625 = vmatprep.subr.bf16.mxu0 0
        %626 = vmatpush1.bf16.xpose.msra.mxu0 %v623
        %627 = vmatprep.subr.bf16.mxu0 0
        %628 = vmatpush1.bf16.xpose.msra.mxu0 0
        %629 = vmatprep.subr.bf16.mxu0 0
        %630 = vmatpush1.bf16.xpose.msra.mxu0 0
        %631 = vmatprep.subr.bf16.mxu0 0
        %632 = vmatpush1.bf16.xpose.msra.mxu0 0
        %633 = vmatprep.subr.bf16.mxu0 0
        %634 = vmatpush1.bf16.xpose.msra.mxu0 0
        %635 = vmatprep.subr.bf16.mxu0 0
        %636 = vmatpush1.bf16.xpose.msra.mxu0 0
        %637 = vmatprep.subr.bf16.mxu0 0
        %638 = vmatpush1.bf16.xpose.msra.mxu0 0
        %639 = vmatprep.subr.bf16.mxu0 0
        %640 = vmatpush1.bf16.xpose.msra.mxu0 0
        %641 = vmatprep.subr.bf16.mxu0 0
        %642 = vmatpush1.bf16.xpose.msra.mxu0 0
        %643 = vmatprep.subr.bf16.mxu0 0
        %644 = vmatpush1.bf16.xpose.msra.mxu0 0
        %645 = vmatprep.subr.bf16.mxu0 0
        %646 = vmatpush1.bf16.xpose.msra.mxu0 0
        %647 = vmatprep.subr.bf16.mxu0 0
        %648 = vmatpush1.bf16.xpose.msra.mxu0 0
        %649 = vmatprep.subr.bf16.mxu0 0
        %650 = vmatpush1.bf16.xpose.msra.mxu0 0
        %651 = vmatprep.subr.bf16.mxu0 0
        %652 = vmatpush1.bf16.xpose.msra.mxu0 0
        %653 = vmatprep.subr.bf16.mxu0 0
        %654 = vmatpush1.bf16.xpose.msra.mxu0 0
        %655 = vmatprep.subr.bf16.mxu0 0
        %656 = vmatpush1.bf16.xpose.msra.mxu0 0
        %657 = vmatprep.mubr.bf16.mxu0 0
        %658 = vmatmul.mubr.bf16.gmra.mrb[0].mxu0 %v620
        %v659 = vpop.f32.mrb[0].mxu0
        %v660 = vadd.f32 0.0, %v659
        %v661 = vpop.f32.mrb[0].mxu0
        %v662 = vpop.f32.mrb[0].mxu0
        %v663 = vpop.f32.mrb[0].mxu0
        %664 = vdwg.mxu0
        %v665 = vmul.f32 %v660, 0.088388346
        %v666 = vsel %vm552, %v665, -inf
        %667 = vmax.xlane.f32.xlu0 %v666
        %v668 = vpop.xlane.xlu0 %667
        %v669 = vsub.f32 %v665, %v668
        %v670 = vmul.f32 %v669, 1.442695
        %v671 = vpow.pop %v670
        %v672 = vsel %vm552, %v671, 0.0
        %673 = vadd.xlane.f32.xlu0 %v672
        %v674 = vpop.xlane.xlu0 %673
        %v675 = vrcp.pop %v674
        %v676 = vmul.f32 %v671, %v675
        %v677 = vpack.c.bf16 %v676, %v676
        %679 = vrot.lane.b32.xlu0 %v487, 96
        %v680 = vpop.permute.xlu0 %679
        %v682 = vsel %vm552, %v677, 0
        %v685 = vsel %vm568, %v680, 0
        %687 = vmatprep.subr.bf16.mxu0 0
        %688 = vmatpush1.bf16.msra.mxu0 %v685
        %689 = vmatprep.subr.bf16.mxu0 0
        %690 = vmatpush1.bf16.msra.mxu0 0
        %691 = vmatprep.subr.bf16.mxu0 0
        %692 = vmatpush1.bf16.msra.mxu0 0
        %693 = vmatprep.subr.bf16.mxu0 0
        %694 = vmatpush1.bf16.msra.mxu0 0
        %695 = vmatprep.subr.bf16.mxu0 0
        %696 = vmatpush1.bf16.msra.mxu0 0
        %697 = vmatprep.subr.bf16.mxu0 0
        %698 = vmatpush1.bf16.msra.mxu0 0
        %699 = vmatprep.subr.bf16.mxu0 0
        %700 = vmatpush1.bf16.msra.mxu0 0
        %701 = vmatprep.subr.bf16.mxu0 0
        %702 = vmatpush1.bf16.msra.mxu0 0
        %703 = vmatprep.subr.bf16.mxu0 0
        %704 = vmatpush1.bf16.msra.mxu0 0
        %705 = vmatprep.subr.bf16.mxu0 0
        %706 = vmatpush1.bf16.msra.mxu0 0
        %707 = vmatprep.subr.bf16.mxu0 0
        %708 = vmatpush1.bf16.msra.mxu0 0
        %709 = vmatprep.subr.bf16.mxu0 0
        %710 = vmatpush1.bf16.msra.mxu0 0
        %711 = vmatprep.subr.bf16.mxu0 0
        %712 = vmatpush1.bf16.msra.mxu0 0
        %713 = vmatprep.subr.bf16.mxu0 0
        %714 = vmatpush1.bf16.msra.mxu0 0
        %715 = vmatprep.subr.bf16.mxu0 0
        %716 = vmatpush1.bf16.msra.mxu0 0
        %717 = vmatprep.subr.bf16.mxu0 0
        %718 = vmatpush1.bf16.msra.mxu0 0
        %719 = vmatprep.mubr.bf16.mxu0 0
        %720 = vmatmul.mubr.bf16.gmra.mrb[0].mxu0 %v682
        %v721 = vpop.f32.mrb[0].mxu0
        %v722 = vadd.f32 0.0, %v721
        %v723 = vpop.f32.mrb[0].mxu0
        %v724 = vpop.f32.mrb[0].mxu0
        %v725 = vpop.f32.mrb[0].mxu0
        %726 = vdwg.mxu0
        %v727 = vpack.c.bf16 %v722, %v722
        %v732 = vunpack.c.l.b16 %v492
        %v733 = vunpack.c.l.b16 %v493
        %v734 = vunpack.c.l.b16 %v494
        %v735 = vunpack.c.l.b16 %v495
        %v736 = vpack.c.b16 %v733, %v732
        %v737 = vpack.c.b16 %v735, %v734
        %v741 = vsel %vm504, %v727, 0
        %743 = vmatprep.subr.bf16.mxu0 0
        %744 = vmatpush1.bf16.msra.mxu0 %v736
        %745 = vmatprep.subr.bf16.mxu0 0
        %746 = vmatpush1.bf16.msra.mxu0 %v737
        %747 = vmatprep.subr.bf16.mxu0 0
        %748 = vmatpush1.bf16.msra.mxu0 0
        %749 = vmatprep.subr.bf16.mxu0 0
        %750 = vmatpush1.bf16.msra.mxu0 0
        %751 = vmatprep.subr.bf16.mxu0 0
        %752 = vmatpush1.bf16.msra.mxu0 0
        %753 = vmatprep.subr.bf16.mxu0 0
        %754 = vmatpush1.bf16.msra.mxu0 0
        %755 = vmatprep.subr.bf16.mxu0 0
        %756 = vmatpush1.bf16.msra.mxu0 0
        %757 = vmatprep.subr.bf16.mxu0 0
        %758 = vmatpush1.bf16.msra.mxu0 0
        %759 = vmatprep.subr.bf16.mxu0 0
        %760 = vmatpush1.bf16.msra.mxu0 0
        %761 = vmatprep.subr.bf16.mxu0 0
        %762 = vmatpush1.bf16.msra.mxu0 0
        %763 = vmatprep.subr.bf16.mxu0 0
        %764 = vmatpush1.bf16.msra.mxu0 0
        %765 = vmatprep.subr.bf16.mxu0 0
        %766 = vmatpush1.bf16.msra.mxu0 0
        %767 = vmatprep.subr.bf16.mxu0 0
        %768 = vmatpush1.bf16.msra.mxu0 0
        %769 = vmatprep.subr.bf16.mxu0 0
        %770 = vmatpush1.bf16.msra.mxu0 0
        %771 = vmatprep.subr.bf16.mxu0 0
        %772 = vmatpush1.bf16.msra.mxu0 0
        %773 = vmatprep.subr.bf16.mxu0 0
        %774 = vmatpush1.bf16.msra.mxu0 0
        %775 = vmatprep.mubr.bf16.mxu0 0
        %776 = vmatmul.mubr.bf16.gmra.mrb[0].mxu0 %v741
        %v777 = vpop.f32.mrb[0].mxu0
        %v778 = vadd.f32 0.0, %v777
        %v779 = vpop.f32.mrb[0].mxu0
        %v780 = vpop.f32.mrb[0].mxu0
        %v781 = vpop.f32.mrb[0].mxu0
        %782 = vdwg.mxu0
        %v787 = vunpack.c.l.b16 %v488
        %v788 = vunpack.c.l.b16 %v489
        %v789 = vunpack.c.l.b16 %v490
        %v790 = vunpack.c.l.b16 %v491
        %v791 = vpack.c.b16 %v788, %v787
        %v792 = vpack.c.b16 %v790, %v789
        %v796 = vsel %vm504, %v612, 0
        %798 = vmatprep.subr.bf16.mxu0 0
        %799 = vmatpush1.bf16.msra.mxu0 %v791
        %800 = vmatprep.subr.bf16.mxu0 0
        %801 = vmatpush1.bf16.msra.mxu0 %v792
        %802 = vmatprep.subr.bf16.mxu0 0
        %803 = vmatpush1.bf16.msra.mxu0 0
        %804 = vmatprep.subr.bf16.mxu0 0
        %805 = vmatpush1.bf16.msra.mxu0 0
        %806 = vmatprep.subr.bf16.mxu0 0
        %807 = vmatpush1.bf16.msra.mxu0 0
        %808 = vmatprep.subr.bf16.mxu0 0
        %809 = vmatpush1.bf16.msra.mxu0 0
        %810 = vmatprep.subr.bf16.mxu0 0
        %811 = vmatpush1.bf16.msra.mxu0 0
        %812 = vmatprep.subr.bf16.mxu0 0
        %813 = vmatpush1.bf16.msra.mxu0 0
        %814 = vmatprep.subr.bf16.mxu0 0
        %815 = vmatpush1.bf16.msra.mxu0 0
        %816 = vmatprep.subr.bf16.mxu0 0
        %817 = vmatpush1.bf16.msra.mxu0 0
        %818 = vmatprep.subr.bf16.mxu0 0
        %819 = vmatpush1.bf16.msra.mxu0 0
        %820 = vmatprep.subr.bf16.mxu0 0
        %821 = vmatpush1.bf16.msra.mxu0 0
        %822 = vmatprep.subr.bf16.mxu0 0
        %823 = vmatpush1.bf16.msra.mxu0 0
        %824 = vmatprep.subr.bf16.mxu0 0
        %825 = vmatpush1.bf16.msra.mxu0 0
        %826 = vmatprep.subr.bf16.mxu0 0
        %827 = vmatpush1.bf16.msra.mxu0 0
        %828 = vmatprep.subr.bf16.mxu0 0
        %829 = vmatpush1.bf16.msra.mxu0 0
        %830 = vmatprep.mubr.bf16.mxu0 0
        %831 = vmatmul.mubr.bf16.gmra.mrb[0].mxu0 %v796
        %v832 = vpop.f32.mrb[0].mxu0
        %v833 = vadd.f32 %v778, %v832
        %v834 = vpop.f32.mrb[0].mxu0
        %v835 = vpop.f32.mrb[0].mxu0
        %v836 = vpop.f32.mrb[0].mxu0
        %837 = vdwg.mxu0
        %838 = vrot.lane.b32.xlu0 %v485, 64
        %v839 = vpop.permute.xlu0 %838
        %840 = vrot.lane.b32.xlu0 %v486, 64
        %v841 = vpop.permute.xlu0 %840
        %v843 = vsel %vm504, %v839, 0
        %v846 = vsel %vm504, %v841, 0
        %848 = vmatprep.subr.bf16.mxu0 0
        %849 = vmatpush1.bf16.xpose.msra.mxu0 %v846
        %850 = vmatprep.subr.bf16.mxu0 0
        %851 = vmatpush1.bf16.xpose.msra.mxu0 0
        %852 = vmatprep.subr.bf16.mxu0 0
        %853 = vmatpush1.bf16.xpose.msra.mxu0 0
        %854 = vmatprep.subr.bf16.mxu0 0
        %855 = vmatpush1.bf16.xpose.msra.mxu0 0
        %856 = vmatprep.subr.bf16.mxu0 0
        %857 = vmatpush1.bf16.xpose.msra.mxu0 0
        %858 = vmatprep.subr.bf16.mxu0 0
        %859 = vmatpush1.bf16.xpose.msra.mxu0 0
        %860 = vmatprep.subr.bf16.mxu0 0
        %861 = vmatpush1.bf16.xpose.msra.mxu0 0
        %862 = vmatprep.subr.bf16.mxu0 0
        %863 = vmatpush1.bf16.xpose.msra.mxu0 0
        %864 = vmatprep.subr.bf16.mxu0 0
        %865 = vmatpush1.bf16.xpose.msra.mxu0 0
        %866 = vmatprep.subr.bf16.mxu0 0
        %867 = vmatpush1.bf16.xpose.msra.mxu0 0
        %868 = vmatprep.subr.bf16.mxu0 0
        %869 = vmatpush1.bf16.xpose.msra.mxu0 0
        %870 = vmatprep.subr.bf16.mxu0 0
        %871 = vmatpush1.bf16.xpose.msra.mxu0 0
        %872 = vmatprep.subr.bf16.mxu0 0
        %873 = vmatpush1.bf16.xpose.msra.mxu0 0
        %874 = vmatprep.subr.bf16.mxu0 0
        %875 = vmatpush1.bf16.xpose.msra.mxu0 0
        %876 = vmatprep.subr.bf16.mxu0 0
        %877 = vmatpush1.bf16.xpose.msra.mxu0 0
        %878 = vmatprep.subr.bf16.mxu0 0
        %879 = vmatpush1.bf16.xpose.msra.mxu0 0
        %880 = vmatprep.mubr.bf16.mxu0 0
        %881 = vmatmul.mubr.bf16.gmra.mrb[0].mxu0 %v843
        %v882 = vpop.f32.mrb[0].mxu0
        %v883 = vadd.f32 0.0, %v882
        %v884 = vpop.f32.mrb[0].mxu0
        %v885 = vpop.f32.mrb[0].mxu0
        %v886 = vpop.f32.mrb[0].mxu0
        %887 = vdwg.mxu0
        %v888 = vmul.f32 %v883, 0.088388346
        %v889 = vsel %vm552, %v888, -inf
        %890 = vmax.xlane.f32.xlu0 %v889
        %v891 = vpop.xlane.xlu0 %890
        %v892 = vsub.f32 %v888, %v891
        %v893 = vmul.f32 %v892, 1.442695
        %v894 = vpow.pop %v893
        %v895 = vsel %vm552, %v894, 0.0
        %896 = vadd.xlane.f32.xlu0 %v895
        %v897 = vpop.xlane.xlu0 %896
        %v898 = vrcp.pop %v897
        %v899 = vmul.f32 %v894, %v898
        %v900 = vpack.c.bf16 %v899, %v899
        %901 = vrot.lane.b32.xlu0 %v487, 64
        %v902 = vpop.permute.xlu0 %901
        %v904 = vsel %vm552, %v900, 0
        %v907 = vsel %vm568, %v902, 0
        %909 = vmatprep.subr.bf16.mxu0 0
        %910 = vmatpush1.bf16.msra.mxu0 %v907
        %911 = vmatprep.subr.bf16.mxu0 0
        %912 = vmatpush1.bf16.msra.mxu0 0
        %913 = vmatprep.subr.bf16.mxu0 0
        %914 = vmatpush1.bf16.msra.mxu0 0
        %915 = vmatprep.subr.bf16.mxu0 0
        %916 = vmatpush1.bf16.msra.mxu0 0
        %917 = vmatprep.subr.bf16.mxu0 0
        %918 = vmatpush1.bf16.msra.mxu0 0
        %919 = vmatprep.subr.bf16.mxu0 0
        %920 = vmatpush1.bf16.msra.mxu0 0
        %921 = vmatprep.subr.bf16.mxu0 0
        %922 = vmatpush1.bf16.msra.mxu0 0
        %923 = vmatprep.subr.bf16.mxu0 0
        %924 = vmatpush1.bf16.msra.mxu0 0
        %925 = vmatprep.subr.bf16.mxu0 0
        %926 = vmatpush1.bf16.msra.mxu0 0
        %927 = vmatprep.subr.bf16.mxu0 0
        %928 = vmatpush1.bf16.msra.mxu0 0
        %929 = vmatprep.subr.bf16.mxu0 0
        %930 = vmatpush1.bf16.msra.mxu0 0
        %931 = vmatprep.subr.bf16.mxu0 0
        %932 = vmatpush1.bf16.msra.mxu0 0
        %933 = vmatprep.subr.bf16.mxu0 0
        %934 = vmatpush1.bf16.msra.mxu0 0
        %935 = vmatprep.subr.bf16.mxu0 0
        %936 = vmatpush1.bf16.msra.mxu0 0
        %937 = vmatprep.subr.bf16.mxu0 0
        %938 = vmatpush1.bf16.msra.mxu0 0
        %939 = vmatprep.subr.bf16.mxu0 0
        %940 = vmatpush1.bf16.msra.mxu0 0
        %941 = vmatprep.mubr.bf16.mxu0 0
        %942 = vmatmul.mubr.bf16.gmra.mrb[0].mxu0 %v904
        %v943 = vpop.f32.mrb[0].mxu0
        %v944 = vadd.f32 0.0, %v943
        %v945 = vpop.f32.mrb[0].mxu0
        %v946 = vpop.f32.mrb[0].mxu0
        %v947 = vpop.f32.mrb[0].mxu0
        %948 = vdwg.mxu0
        %v949 = vpack.c.bf16 %v944, %v944
        %v954 = vunpack.c.l.b16 %v496
        %v955 = vunpack.c.l.b16 %v497
        %v956 = vunpack.c.l.b16 %v498
        %v957 = vunpack.c.l.b16 %v499
        %v958 = vpack.c.b16 %v955, %v954
        %v959 = vpack.c.b16 %v957, %v956
        %v963 = vsel %vm504, %v949, 0
        %965 = vmatprep.subr.bf16.mxu0 0
        %966 = vmatpush1.bf16.msra.mxu0 %v958
        %967 = vmatprep.subr.bf16.mxu0 0
        %968 = vmatpush1.bf16.msra.mxu0 %v959
        %969 = vmatprep.subr.bf16.mxu0 0
        %970 = vmatpush1.bf16.msra.mxu0 0
        %971 = vmatprep.subr.bf16.mxu0 0
        %972 = vmatpush1.bf16.msra.mxu0 0
        %973 = vmatprep.subr.bf16.mxu0 0
        %974 = vmatpush1.bf16.msra.mxu0 0
        %975 = vmatprep.subr.bf16.mxu0 0
        %976 = vmatpush1.bf16.msra.mxu0 0
        %977 = vmatprep.subr.bf16.mxu0 0
        %978 = vmatpush1.bf16.msra.mxu0 0
        %979 = vmatprep.subr.bf16.mxu0 0
        %980 = vmatpush1.bf16.msra.mxu0 0
        %981 = vmatprep.subr.bf16.mxu0 0
        %982 = vmatpush1.bf16.msra.mxu0 0
        %983 = vmatprep.subr.bf16.mxu0 0
        %984 = vmatpush1.bf16.msra.mxu0 0
        %985 = vmatprep.subr.bf16.mxu0 0
        %986 = vmatpush1.bf16.msra.mxu0 0
        %987 = vmatprep.subr.bf16.mxu0 0
        %988 = vmatpush1.bf16.msra.mxu0 0
        %989 = vmatprep.subr.bf16.mxu0 0
        %990 = vmatpush1.bf16.msra.mxu0 0
        %991 = vmatprep.subr.bf16.mxu0 0
        %992 = vmatpush1.bf16.msra.mxu0 0
        %993 = vmatprep.subr.bf16.mxu0 0
        %994 = vmatpush1.bf16.msra.mxu0 0
        %995 = vmatprep.subr.bf16.mxu0 0
        %996 = vmatpush1.bf16.msra.mxu0 0
        %997 = vmatprep.mubr.bf16.mxu0 0
        %998 = vmatmul.mubr.bf16.gmra.mrb[0].mxu0 %v963
        %v999 = vpop.f32.mrb[0].mxu0
        %v1000 = vadd.f32 0.0, %v999
        %v1001 = vpop.f32.mrb[0].mxu0
        %v1002 = vpop.f32.mrb[0].mxu0
        %v1003 = vpop.f32.mrb[0].mxu0
        %1004 = vdwg.mxu0
        %v1005 = vadd.f32 %v833, %v1000
        %1006 = vrot.lane.b32.xlu0 %v485, 32
        %v1007 = vpop.permute.xlu0 %1006
        %1008 = vrot.lane.b32.xlu0 %v486, 32
        %v1009 = vpop.permute.xlu0 %1008
        %v1011 = vsel %vm504, %v1007, 0
        %v1014 = vsel %vm504, %v1009, 0
        %1016 = vmatprep.subr.bf16.mxu0 0
        %1017 = vmatpush1.bf16.xpose.msra.mxu0 %v1014
        %1018 = vmatprep.subr.bf16.mxu0 0
        %1019 = vmatpush1.bf16.xpose.msra.mxu0 0
        %1020 = vmatprep.subr.bf16.mxu0 0
        %1021 = vmatpush1.bf16.xpose.msra.mxu0 0
        %1022 = vmatprep.subr.bf16.mxu0 0
        %1023 = vmatpush1.bf16.xpose.msra.mxu0 0
        %1024 = vmatprep.subr.bf16.mxu0 0
        %1025 = vmatpush1.bf16.xpose.msra.mxu0 0
        %1026 = vmatprep.subr.bf16.mxu0 0
        %1027 = vmatpush1.bf16.xpose.msra.mxu0 0
        %1028 = vmatprep.subr.bf16.mxu0 0
        %1029 = vmatpush1.bf16.xpose.msra.mxu0 0
        %1030 = vmatprep.subr.bf16.mxu0 0
        %1031 = vmatpush1.bf16.xpose.msra.mxu0 0
        %1032 = vmatprep.subr.bf16.mxu0 0
        %1033 = vmatpush1.bf16.xpose.msra.mxu0 0
        %1034 = vmatprep.subr.bf16.mxu0 0
        %1035 = vmatpush1.bf16.xpose.msra.mxu0 0
        %1036 = vmatprep.subr.bf16.mxu0 0
        %1037 = vmatpush1.bf16.xpose.msra.mxu0 0
        %1038 = vmatprep.subr.bf16.mxu0 0
        %1039 = vmatpush1.bf16.xpose.msra.mxu0 0
        %1040 = vmatprep.subr.bf16.mxu0 0
        %1041 = vmatpush1.bf16.xpose.msra.mxu0 0
        %1042 = vmatprep.subr.bf16.mxu0 0
        %1043 = vmatpush1.bf16.xpose.msra.mxu0 0
        %1044 = vmatprep.subr.bf16.mxu0 0
        %1045 = vmatpush1.bf16.xpose.msra.mxu0 0
        %1046 = vmatprep.subr.bf16.mxu0 0
        %1047 = vmatpush1.bf16.xpose.msra.mxu0 0
        %1048 = vmatprep.mubr.bf16.mxu0 0
        %1049 = vmatmul.mubr.bf16.gmra.mrb[0].mxu0 %v1011
        %v1050 = vpop.f32.mrb[0].mxu0
        %v1051 = vadd.f32 0.0, %v1050
        %v1052 = vpop.f32.mrb[0].mxu0
        %v1053 = vpop.f32.mrb[0].mxu0
        %v1054 = vpop.f32.mrb[0].mxu0
        %1055 = vdwg.mxu0
        %v1056 = vmul.f32 %v1051, 0.088388346
        %v1057 = vsel %vm552, %v1056, -inf
        %1058 = vmax.xlane.f32.xlu0 %v1057
        %v1059 = vpop.xlane.xlu0 %1058
        %v1060 = vsub.f32 %v1056, %v1059
        %v1061 = vmul.f32 %v1060, 1.442695
        %v1062 = vpow.pop %v1061
        %v1063 = vsel %vm552, %v1062, 0.0
        %1064 = vadd.xlane.f32.xlu0 %v1063
        %v1065 = vpop.xlane.xlu0 %1064
        %v1066 = vrcp.pop %v1065
        %v1067 = vmul.f32 %v1062, %v1066
        %v1068 = vpack.c.bf16 %v1067, %v1067
        %1069 = vrot.lane.b32.xlu0 %v487, 32
        %v1070 = vpop.permute.xlu0 %1069
        %v1072 = vsel %vm552, %v1068, 0
        %v1075 = vsel %vm568, %v1070, 0
        %1077 = vmatprep.subr.bf16.mxu0 0
        %1078 = vmatpush1.bf16.msra.mxu0 %v1075
        %1079 = vmatprep.subr.bf16.mxu0 0
        %1080 = vmatpush1.bf16.msra.mxu0 0
        %1081 = vmatprep.subr.bf16.mxu0 0
        %1082 = vmatpush1.bf16.msra.mxu0 0
        %1083 = vmatprep.subr.bf16.mxu0 0
        %1084 = vmatpush1.bf16.msra.mxu0 0
        %1085 = vmatprep.subr.bf16.mxu0 0
        %1086 = vmatpush1.bf16.msra.mxu0 0
        %1087 = vmatprep.subr.bf16.mxu0 0
        %1088 = vmatpush1.bf16.msra.mxu0 0
        %1089 = vmatprep.subr.bf16.mxu0 0
        %1090 = vmatpush1.bf16.msra.mxu0 0
        %1091 = vmatprep.subr.bf16.mxu0 0
        %1092 = vmatpush1.bf16.msra.mxu0 0
        %1093 = vmatprep.subr.bf16.mxu0 0
        %1094 = vmatpush1.bf16.msra.mxu0 0
        %1095 = vmatprep.subr.bf16.mxu0 0
        %1096 = vmatpush1.bf16.msra.mxu0 0
        %1097 = vmatprep.subr.bf16.mxu0 0
        %1098 = vmatpush1.bf16.msra.mxu0 0
        %1099 = vmatprep.subr.bf16.mxu0 0
        %1100 = vmatpush1.bf16.msra.mxu0 0
        %1101 = vmatprep.subr.bf16.mxu0 0
        %1102 = vmatpush1.bf16.msra.mxu0 0
        %1103 = vmatprep.subr.bf16.mxu0 0
        %1104 = vmatpush1.bf16.msra.mxu0 0
        %1105 = vmatprep.subr.bf16.mxu0 0
        %1106 = vmatpush1.bf16.msra.mxu0 0
        %1107 = vmatprep.subr.bf16.mxu0 0
        %1108 = vmatpush1.bf16.msra.mxu0 0
        %1109 = vmatprep.mubr.bf16.mxu0 0
        %1110 = vmatmul.mubr.bf16.gmra.mrb[0].mxu0 %v1072
        %v1111 = vpop.f32.mrb[0].mxu0
        %v1112 = vadd.f32 0.0, %v1111
        %v1113 = vpop.f32.mrb[0].mxu0
        %v1114 = vpop.f32.mrb[0].mxu0
        %v1115 = vpop.f32.mrb[0].mxu0
        %1116 = vdwg.mxu0
        %v1117 = vpack.c.bf16 %v1112, %v1112
        %v1122 = vunpack.c.l.b16 %v500
        %v1123 = vunpack.c.l.b16 %v501
        %v1124 = vunpack.c.l.b16 %v502
        %v1125 = vunpack.c.l.b16 %v503
        %v1126 = vpack.c.b16 %v1123, %v1122
        %v1127 = vpack.c.b16 %v1125, %v1124
        %v1131 = vsel %vm504, %v1117, 0
        %1133 = vmatprep.subr.bf16.mxu0 0
        %1134 = vmatpush1.bf16.msra.mxu0 %v1126
        %1135 = vmatprep.subr.bf16.mxu0 0
        %1136 = vmatpush1.bf16.msra.mxu0 %v1127
        %1137 = vmatprep.subr.bf16.mxu0 0
        %1138 = vmatpush1.bf16.msra.mxu0 0
        %1139 = vmatprep.subr.bf16.mxu0 0
        %1140 = vmatpush1.bf16.msra.mxu0 0
        %1141 = vmatprep.subr.bf16.mxu0 0
        %1142 = vmatpush1.bf16.msra.mxu0 0
        %1143 = vmatprep.subr.bf16.mxu0 0
        %1144 = vmatpush1.bf16.msra.mxu0 0
        %1145 = vmatprep.subr.bf16.mxu0 0
        %1146 = vmatpush1.bf16.msra.mxu0 0
        %1147 = vmatprep.subr.bf16.mxu0 0
        %1148 = vmatpush1.bf16.msra.mxu0 0
        %1149 = vmatprep.subr.bf16.mxu0 0
        %1150 = vmatpush1.bf16.msra.mxu0 0
        %1151 = vmatprep.subr.bf16.mxu0 0
        %1152 = vmatpush1.bf16.msra.mxu0 0
        %1153 = vmatprep.subr.bf16.mxu0 0
        %1154 = vmatpush1.bf16.msra.mxu0 0
        %1155 = vmatprep.subr.bf16.mxu0 0
        %1156 = vmatpush1.bf16.msra.mxu0 0
        %1157 = vmatprep.subr.bf16.mxu0 0
        %1158 = vmatpush1.bf16.msra.mxu0 0
        %1159 = vmatprep.subr.bf16.mxu0 0
        %1160 = vmatpush1.bf16.msra.mxu0 0
        %1161 = vmatprep.subr.bf16.mxu0 0
        %1162 = vmatpush1.bf16.msra.mxu0 0
        %1163 = vmatprep.subr.bf16.mxu0 0
        %1164 = vmatpush1.bf16.msra.mxu0 0
        %1165 = vmatprep.mubr.bf16.mxu0 0
        %1166 = vmatmul.mubr.bf16.gmra.mrb[0].mxu0 %v1131
        %v1167 = vpop.f32.mrb[0].mxu0
        %v1168 = vadd.f32 0.0, %v1167
        %v1169 = vpop.f32.mrb[0].mxu0
        %v1170 = vpop.f32.mrb[0].mxu0
        %v1171 = vpop.f32.mrb[0].mxu0
        %1172 = vdwg.mxu0
        %v1173 = vadd.f32 %v1005, %v1168
        %v1174 = vld [vmem:[%s3] sm:$0x1]
        %v1176 = vlaneseq
        %v1177 = vshrl.u32 %v1176, 7
        %v1178 = vsub.s32 0, %v1177
        %v1179 = vrot.slane %v1174, %v1178
        %v1181 = vadd.f32 %v1173, %v1179
        %1182 = vst [vmem:[%s241] sm:$0xff] %v1181
        %s1183 = sand.u32 %s119, 1
        %s1184 = scalar_lea.sflag [#allocation4], %s1183
        %s1185 = sand.u32 %s119, 1
        %s1186 = smul.addr %s1185, 8
        %s1187 = scalar_lea.vmem [#allocation8], %s1186
        // Predicated region
        $region49: #{tpu_custom_call.1} parent=35 // pred_check
          %p1188 = pneg %p129
        $region50: #{tpu_custom_call.1} parent=35 // pred_check_branch
          %1190 = sbr.rel (%p1188) target = $region52
        $region51: #{tpu_custom_call.1} parent=35 // pred_region
          %s1192 = ssub.s32 128, 128
          %1193 = vsyncadd %s1184, %s1192
          %s1194 = smul.addr %s22, 128
          %s1195 = scalar_lea.hbm %s4, %s1194
          %s1197 = sshll.u32 %s1187, 4
          %s1198 = int_to_ptr.vmem [resolvable:$true] %s1197
          %1200 = dma.vmem_to_hbm [thread:$0]  %s1198, 128, %s1195, %s1184
        $region52: #{tpu_custom_call.1} parent=35 // pred_fallthru
          _
      $region36: #{tpu_custom_call.1} parent=5 // pred_fallthru
        _
      %p1201 = scmp.le.s32.totalorder 2, %s17
      // Predicated region
      $region53: #{tpu_custom_call.1} parent=5 // pred_check
        %p1202 = pneg %p1201
      $region54: #{tpu_custom_call.1} parent=5 // pred_check_branch
        %1204 = sbr.rel (%p1202) target = $region56
      $region55: #{tpu_custom_call.1} parent=5 // pred_region
        %s1205 = ssub.s32 %s17, 2
        // Predicated region
        $region57: #{tpu_custom_call.1} parent=55 // pred_check
          %p1206 = pneg %p135
        $region58: #{tpu_custom_call.1} parent=55 // pred_check_branch
          %1208 = sbr.rel (%p1206) target = $region60
        $region59: #{tpu_custom_call.1} parent=55 // pred_region
          %s1209 = sand.u32 %s120, 1
          %s1210 = scalar_lea.sflag [#allocation4], %s1209
          %s1211 = sand.u32 %s120, 1
          %s1212 = smul.addr %s1211, 8
          %s1213 = scalar_lea.vmem [#allocation8], %s1212
          %1214 = dma.done %s1210, 128
        $region60: #{tpu_custom_call.1} parent=55 // pred_fallthru
          _
      $region56: #{tpu_custom_call.1} parent=5 // pred_fallthru
        _
    $region6: #{tpu_custom_call.1} parent=1 // loop_footer
      %s21 = sadd.s32 1, %s17
    $region7: #{tpu_custom_call.1} parent=1 // loop_footer_branch
      %16 = sbr.rel target = $region3
    $region8: #{tpu_custom_call.1} parent=1 // loop_exit
      _
    %1215 = vsyncpa [#allocation3], 1
    %s1216 = scalar_lea.sflag [#allocation3], 1
    %1217 = vsyncpa %s1216, 1
    %1218 = vsyncpa [#allocation6], 1
    %1219 = vsyncpa [#allocation4], 1
    %s1220 = scalar_lea.sflag [#allocation4], 1
    %1221 = vsyncpa %s1220, 1

</llo_original>
